<compile_context>
chip_gen: v7x
topology: tpu7x:2x2x1
jax: 0.10.0
libtpu: 0.0.40
codegen_flags: <defaults>
</compile_context>

<pallas_src>
import functools

import jax
import jax.numpy as jnp
from jax.experimental import pallas as pl
from jax.experimental.pallas import tpu as pltpu


def _round_up(x, m):
    return ((x + m - 1) // m) * m


def _head_kernel(x_ref, w1_ref, b1_ref, w2_ref, b2_ref, o_ref):
    # x: [TB, d_model] (possibly bf16)
    x = x_ref[...]

    # pre_classifier (author bits already folded into b1_eff) + ReLU
    h = jnp.dot(x, w1_ref[...], preferred_element_type=jnp.float32) + b1_ref[...]
    h = jnp.maximum(h, 0.0)

    # Dropout(p=0.3): eval-mode identity (deterministic forward).
    # TODO(synk): training-mode dropout would use pltpu.prng_seed / prng_random_bits.

    # classifier: Linear(d_model -> n_pad), padded columns carry a -1e30 bias
    h = h.astype(w2_ref.dtype)
    logits = jnp.dot(h, w2_ref[...], preferred_element_type=jnp.float32) + b2_ref[...]

    # softmax over the (lane-dense, padded) last dim; padded cols -> exp(~-inf) = 0
    m = jnp.max(logits, axis=-1, keepdims=True)
    e = jnp.exp(logits - m)
    denom = jnp.sum(e, axis=-1, keepdims=True)
    o_ref[...] = e * pl.reciprocal(denom, approx=True)


@functools.partial(jax.jit, static_argnames=("block_b",))
def _classifier_head(x, w1h, b1_eff, w2p, b2p, *, block_b=512):
    """x: [B, d_model] -> padded softmax probs [B, n_pad] (f32)."""
    B, d = x.shape
    n_pad = w2p.shape[1]

    tb = min(block_b, _round_up(B, 8))
    bp = _round_up(B, tb)
    if bp != B:
        x = jnp.pad(x, ((0, bp - B), (0, 0)))

    out = pl.pallas_call(
        _head_kernel,
        out_shape=jax.ShapeDtypeStruct((bp, n_pad), jnp.float32),
        grid_spec=pltpu.PrefetchScalarGridSpec(
            num_scalar_prefetch=0,
            grid=(bp // tb,),
            in_specs=[
                pl.BlockSpec((tb, d), lambda i: (i, 0)),          # x tile (pipelined)
                pl.BlockSpec((d, w1h.shape[1]), lambda i: (0, 0)),  # W1 (resident)
                pl.BlockSpec((1, b1_eff.shape[1]), lambda i: (0, 0)),
                pl.BlockSpec((w2p.shape[0], n_pad), lambda i: (0, 0)),
                pl.BlockSpec((1, n_pad), lambda i: (0, 0)),
            ],
            out_specs=pl.BlockSpec((tb, n_pad), lambda i: (i, 0)),
        ),
        compiler_params=pltpu.CompilerParams(
            dimension_semantics=("parallel",),
        ),
    )(x, w1h, b1_eff, w2p, b2p)
    return out[:B]


def author_encoding(author_index, n_bits=5):
    """5-bit binary encoding, MSB first (matches the PyTorch author_encoding)."""
    shifts = jnp.arange(n_bits - 1, -1, -1, dtype=jnp.int32)
    return (jnp.right_shift(jnp.int32(author_index), shifts) & 1).astype(jnp.float32)


def baseline_classifier_global_forward(
    hidden_situ, author_index, params, *, compute_dtype=jnp.float32, block_b=512
):
    """hidden_situ: [B, d_model] CLS embeddings (encoder output, computed externally).

    compute_dtype=jnp.bfloat16 is recommended on v6e/v7x (halves HBM traffic);
    biases / accumulation / softmax stay in f32 regardless.
    """
    w1, b1 = params["w1"], params["b1"]          # [d_model+5, d_model], [1, d_model]
    w2, b2 = params["w2"], params["b2"]          # [d_model, n_classes], [1, n_classes]
    n_classes = w2.shape[1]

    # Fold the constant author-bit rows of W1 into the bias (same row for every
    # batch element) -> kernel contracts over a clean K = d_model.
    bits = author_encoding(author_index)                                   # [5]
    b1_eff = (b1 + bits[None, :] @ w1[:5, :]).astype(jnp.float32)          # [1, d_model]
    w1h = w1[5:, :].astype(compute_dtype)                                  # [d_model, d_model]

    # Pad the classifier to a lane-dense output tile; padded logits biased to ~-inf.
    n_pad = _round_up(max(n_classes, 128), 128)
    w2p = jnp.pad(w2, ((0, 0), (0, n_pad - n_classes))).astype(compute_dtype)
    b2p = jnp.pad(
        b2.astype(jnp.float32), ((0, 0), (0, n_pad - n_classes)), constant_values=-1e30
    )

    x = hidden_situ.astype(compute_dtype)
    probs = _classifier_head(x, w1h, b1_eff, w2p, b2p, block_b=block_b)
    return probs[:, :n_classes]


def init_params(key, d_model, n_classes):
    k1, k2, k3, k4 = jax.random.split(key, 4)
    bound1 = 1.0 / jnp.sqrt(d_model + 5)
    bound2 = 1.0 / jnp.sqrt(d_model)
    return {
        # stored transposed relative to torch (in_features, out_features) for x @ W
        "w1": jax.random.uniform(k1, (d_model + 5, d_model), jnp.float32, -bound1, bound1),
        "b1": jax.random.uniform(k2, (1, d_model), jnp.float32, -bound1, bound1),
        "w2": jax.random.uniform(k3, (d_model, n_classes), jnp.float32, -bound2, bound2),
        "b2": jax.random.uniform(k4, (1, n_classes), jnp.float32, -bound2, bound2),
    }


def _reference(hidden_situ, author_index, params):
    """Plain-JAX forward matching the original PyTorch module (eval mode)."""
    B = hidden_situ.shape[0]
    bits = author_encoding(author_index)
    x = jnp.concatenate([jnp.broadcast_to(bits, (B, 5)), hidden_situ], axis=1)
    h = jnp.maximum(x @ params["w1"] + params["b1"], 0.0)
    return jax.nn.softmax(h @ params["w2"] + params["b2"], axis=-1)


if __name__ == "__main__":
    key = jax.random.PRNGKey(0)
    B = 2            # nbatches
    d_model = 32
    n_classes = 2
    author_index = 3

    k_param, k_hidden = jax.random.split(key)
    params = init_params(k_param, d_model, n_classes)
    # stand-in for DistilBERT last_hidden_state[:, 0, :]
    hidden_situ = jax.random.normal(k_hidden, (B, d_model), jnp.float32)

    ref = _reference(hidden_situ, author_index, params)

    # f32 path (tight check; approx reciprocal gives ~1e-3-level differences)
    pred_f32 = baseline_classifier_global_forward(
        hidden_situ, author_index, params, compute_dtype=jnp.float32
    )
    pred_f32 = jax.block_until_ready(pred_f32)
    assert pred_f32.shape == (B, n_classes)
    assert jnp.allclose(pred_f32, ref, atol=5e-3, rtol=5e-3)
    assert jnp.allclose(jnp.sum(pred_f32, axis=-1), 1.0, atol=5e-3)

    # bf16 path (recommended on v6e/v7x; looser check)
    pred_bf16 = baseline_classifier_global_forward(
        hidden_situ, author_index, params, compute_dtype=jnp.bfloat16
    )
    pred_bf16 = jax.block_until_ready(pred_bf16)
    assert pred_bf16.shape == (B, n_classes)
    assert jnp.allclose(pred_bf16, ref, atol=5e-2, rtol=5e-2)
    assert jnp.allclose(jnp.sum(pred_bf16, axis=-1), 1.0, atol=1e-2)

    print("KERNEL_OK")
</pallas_src>

<mosaic_0001>
module attributes {stable_mosaic.version = 11 : i64} {
  func.func @_head_kernel(%arg0: i32, %arg1: memref<8x32xf32, #tpu.memory_space<vmem>>, %arg2: memref<32x32xf32, #tpu.memory_space<vmem>>, %arg3: memref<1x32xf32, #tpu.memory_space<vmem>>, %arg4: memref<32x128xf32, #tpu.memory_space<vmem>>, %arg5: memref<1x128xf32, #tpu.memory_space<vmem>>, %arg6: memref<8x128xf32, #tpu.memory_space<vmem>>) attributes {dimension_semantics = [#tpu.dimension_semantics<parallel>], iteration_bounds = array<i64: 1>, scalar_prefetch = 0 : i64, scratch_operands = 0 : i64, tpu.core_type = #tpu.core_type<tc>, window_params = [{transform_indices = @transform_0, window_bounds = array<i64: 8, 32>}, {pipeline_mode = #tpu.pipeline_mode<synchronous>, transform_indices = @transform_1, window_bounds = array<i64: 32, 32>}, {pipeline_mode = #tpu.pipeline_mode<synchronous>, transform_indices = @transform_2, window_bounds = array<i64: 1, 32>}, {pipeline_mode = #tpu.pipeline_mode<synchronous>, transform_indices = @transform_3, window_bounds = array<i64: 32, 128>}, {pipeline_mode = #tpu.pipeline_mode<synchronous>, transform_indices = @transform_4, window_bounds = array<i64: 1, 128>}, {transform_indices = @transform_5, window_bounds = array<i64: 8, 128>}]} {
    %c0 = arith.constant 0 : index
    %c0_0 = arith.constant 0 : index
    %0 = vector.load %arg1[%c0, %c0_0] : memref<8x32xf32, #tpu.memory_space<vmem>>, vector<8x32xf32>
    %c0_1 = arith.constant 0 : index
    %c0_2 = arith.constant 0 : index
    %1 = vector.load %arg2[%c0_1, %c0_2] : memref<32x32xf32, #tpu.memory_space<vmem>>, vector<32x32xf32>
    %cst = arith.constant dense<0.000000e+00> : vector<8x32xf32>
    %2 = tpu.matmul %0, %1, %cst {dimension_numbers = #tpu.dot_dimension_numbers<[1], [0], [0], [1], [0, 0, 1, 1], [], []>} : vector<8x32xf32>, vector<32x32xf32>, vector<8x32xf32> -> vector<8x32xf32>
    %c0_3 = arith.constant 0 : index
    %c0_4 = arith.constant 0 : index
    %3 = vector.load %arg3[%c0_3, %c0_4] : memref<1x32xf32, #tpu.memory_space<vmem>>, vector<1x32xf32>
    %4 = vector.broadcast %3 : vector<1x32xf32> to vector<8x32xf32>
    %5 = arith.addf %2, %4 : vector<8x32xf32>
    %cst_5 = arith.constant 0.000000e+00 : f32
    %6 = vector.broadcast %cst_5 : f32 to vector<8x32xf32>
    %7 = arith.maximumf %5, %6 : vector<8x32xf32>
    %c0_6 = arith.constant 0 : index
    %c0_7 = arith.constant 0 : index
    %8 = vector.load %arg4[%c0_6, %c0_7] : memref<32x128xf32, #tpu.memory_space<vmem>>, vector<32x128xf32>
    %cst_8 = arith.constant dense<0.000000e+00> : vector<8x128xf32>
    %9 = tpu.matmul %7, %8, %cst_8 {dimension_numbers = #tpu.dot_dimension_numbers<[1], [0], [0], [1], [0, 0, 1, 1], [], []>} : vector<8x32xf32>, vector<32x128xf32>, vector<8x128xf32> -> vector<8x128xf32>
    %c0_9 = arith.constant 0 : index
    %c0_10 = arith.constant 0 : index
    %10 = vector.load %arg5[%c0_9, %c0_10] : memref<1x128xf32, #tpu.memory_space<vmem>>, vector<1x128xf32>
    %11 = vector.broadcast %10 : vector<1x128xf32> to vector<8x128xf32>
    %12 = arith.addf %9, %11 : vector<8x128xf32>
    %cst_11 = arith.constant dense<0xFF800000> : vector<8xf32>
    %13 = vector.multi_reduction <maximumf>, %12, %cst_11 [1] : vector<8x128xf32> to vector<8xf32>
    %14 = vector.shape_cast %13 : vector<8xf32> to vector<8x1xf32>
    %15 = vector.broadcast %14 : vector<8x1xf32> to vector<8x128xf32>
    %16 = arith.subf %12, %15 : vector<8x128xf32>
    %17 = math.exp %16 : vector<8x128xf32>
    %cst_12 = arith.constant dense<0.000000e+00> : vector<8xf32>
    %18 = vector.multi_reduction <add>, %17, %cst_12 [1] : vector<8x128xf32> to vector<8xf32>
    %19 = vector.shape_cast %18 : vector<8xf32> to vector<8x1xf32>
    %20 = tpu.reciprocal %19 {approx = true} : vector<8x1xf32> -> vector<8x1xf32>
    %21 = vector.broadcast %20 : vector<8x1xf32> to vector<8x128xf32>
    %22 = arith.mulf %17, %21 : vector<8x128xf32>
    %c0_13 = arith.constant 0 : index
    %c0_14 = arith.constant 0 : index
    %23 = vector.load %arg6[%c0_13, %c0_14] : memref<8x128xf32, #tpu.memory_space<vmem>>, vector<8x128xf32>
    tpu.vector_store %arg6[%c0_13, %c0_14], %22 {strides = array<i32>} : memref<8x128xf32, #tpu.memory_space<vmem>>, vector<8x128xf32>,
    return
  }
  func.func @transform_0(%arg0: i32) -> (i32, i32) {
    %c0_i32 = arith.constant 0 : i32
    %c0_i32_0 = arith.constant 0 : i32
    return %arg0, %c0_i32 : i32, i32
  }
  func.func @transform_1(%arg0: i32) -> (i32, i32) {
    %c0_i32 = arith.constant 0 : i32
    %c0_i32_0 = arith.constant 0 : i32
    %c0_i32_1 = arith.constant 0 : i32
    return %c0_i32, %c0_i32_0 : i32, i32
  }
  func.func @transform_2(%arg0: i32) -> (i32, i32) {
    %c0_i32 = arith.constant 0 : i32
    %c0_i32_0 = arith.constant 0 : i32
    %c0_i32_1 = arith.constant 0 : i32
    return %c0_i32, %c0_i32_0 : i32, i32
  }
  func.func @transform_3(%arg0: i32) -> (i32, i32) {
    %c0_i32 = arith.constant 0 : i32
    %c0_i32_0 = arith.constant 0 : i32
    %c0_i32_1 = arith.constant 0 : i32
    return %c0_i32, %c0_i32_0 : i32, i32
  }
  func.func @transform_4(%arg0: i32) -> (i32, i32) {
    %c0_i32 = arith.constant 0 : i32
    %c0_i32_0 = arith.constant 0 : i32
    %c0_i32_1 = arith.constant 0 : i32
    return %c0_i32, %c0_i32_0 : i32, i32
  }
  func.func @transform_5(%arg0: i32) -> (i32, i32) {
    %c0_i32 = arith.constant 0 : i32
    %c0_i32_0 = arith.constant 0 : i32
    return %arg0, %c0_i32 : i32, i32
  }
}

</mosaic_0001>

<llo_original>
// kernel: _classifier_head.1
$region0: #{_classifier_head.1}
  #allocation0 [shape = 'u32[]', space=smem, size = 0x4, offset = 0x4, fixed_abs, tag = 'smem constant byte address 0x4 - core index']
  #allocation1 [shape = 'u32[144,128]{1,0:T(1,128)}', space=vmem, size = 0x12000, scoped, tag = 'internal scratch']
  %s0 = inlined_call_operand.vmem [shape: f32[8,32], index: 0, kind: input, shape index: {}]
  %s1 = inlined_call_operand.hbm [shape: f32[32,32], index: 1, kind: input, shape index: {}]
  %s2 = inlined_call_operand.vmem [shape: f32[1,32], index: 2, kind: input, shape index: {}]
  %s3 = inlined_call_operand.hbm [shape: f32[32,128], index: 3, kind: input, shape index: {}]
  %s4 = inlined_call_operand.vmem [shape: f32[1,128], index: 4, kind: input, shape index: {}]
  %s5 = inlined_call_operand.vmem [shape: f32[8,128], index: 5, kind: output, shape index: {}]
  %s6 = sld [smem:[#allocation0]]
  $region38: #{_classifier_head.1} parent=0
    _
  %s8 = ssub.s32 1, %s6
  %s9 = scalar_select 0, %s8, %s6
  $region1: #{_classifier_head.1} parent=0
    #allocation2 [shape = 'u8[16384]{0}', space=vmem, size = 0x4000, scoped, tag = 'input window, operand 1, single buffered']
    #allocation3 [shape = 's32[1]{0}', space=sflag, size = 0x4, scoped, tag = 'scoped memory for _classifier_head.1']
    #allocation4 [shape = 'u8[16384]{0}', space=vmem, size = 0x4000, scoped, tag = 'input window, operand 3, single buffered']
    #allocation5 [shape = 's32[1]{0}', space=sflag, size = 0x4, scoped, tag = 'scoped memory for _classifier_head.1']
    %10 = vsyncpa [#allocation3], 0
    %11 = vsyncpa [#allocation5], 0
    // Predicated region
    $region2: #{_classifier_head.1} parent=1 // pred_check
      _
    $region3: #{_classifier_head.1} parent=1 // pred_check_branch
      %13 = sbr.rel (0) target = $region5
    $region4: #{_classifier_head.1} parent=1 // pred_region
      _
    $region5: #{_classifier_head.1} parent=1 // pred_fallthru
      _
    // Predicated region
    $region6: #{_classifier_head.1} parent=1 // pred_check
      _
    $region7: #{_classifier_head.1} parent=1 // pred_check_branch
      %15 = sbr.rel (0) target = $region9
    $region8: #{_classifier_head.1} parent=1 // pred_region
      %s17 = ssub.s32 512, 512
      %18 = vsyncadd [#allocation3], %s17
      %s19 = sshll.u32 [#allocation2], 4
      %s20 = int_to_ptr.vmem [resolvable:$true] %s19
      %25 = dma.hbm_to_vmem [thread:$0]  %s1, 512, %s20, [#allocation3], 128, 128, 8
    $region9: #{_classifier_head.1} parent=1 // pred_fallthru
      _
    // Predicated region
    $region10: #{_classifier_head.1} parent=1 // pred_check
      _
    $region11: #{_classifier_head.1} parent=1 // pred_check_branch
      %27 = sbr.rel (0) target = $region13
    $region12: #{_classifier_head.1} parent=1 // pred_region
      _
    $region13: #{_classifier_head.1} parent=1 // pred_fallthru
      _
    // Predicated region
    $region14: #{_classifier_head.1} parent=1 // pred_check
      _
    $region15: #{_classifier_head.1} parent=1 // pred_check_branch
      %29 = sbr.rel (0) target = $region17
    $region16: #{_classifier_head.1} parent=1 // pred_region
      %s31 = ssub.s32 512, 512
      %32 = vsyncadd [#allocation5], %s31
      %s33 = sshll.u32 [#allocation4], 4
      %s34 = int_to_ptr.vmem [resolvable:$true] %s33
      %39 = dma.hbm_to_vmem [thread:$0]  %s3, 512, %s34, [#allocation5], 128, 128, 8
    $region17: #{_classifier_head.1} parent=1 // pred_fallthru
      _
    // Predicated region
    $region18: #{_classifier_head.1} parent=1 // pred_check
      _
    $region19: #{_classifier_head.1} parent=1 // pred_check_branch
      %41 = sbr.rel (0) target = $region21
    $region20: #{_classifier_head.1} parent=1 // pred_region
      _
    $region21: #{_classifier_head.1} parent=1 // pred_fallthru
      _
    // Predicated region
    $region22: #{_classifier_head.1} parent=1 // pred_check
      _
    $region23: #{_classifier_head.1} parent=1 // pred_check_branch
      %43 = sbr.rel (0) target = $region25
    $region24: #{_classifier_head.1} parent=1 // pred_region
      %44 = dma.done [#allocation3], 512
    $region25: #{_classifier_head.1} parent=1 // pred_fallthru
      _
    // Predicated region
    $region26: #{_classifier_head.1} parent=1 // pred_check
      _
    $region27: #{_classifier_head.1} parent=1 // pred_check_branch
      %46 = sbr.rel (0) target = $region29
    $region28: #{_classifier_head.1} parent=1 // pred_region
      %47 = dma.done [#allocation5], 512
    $region29: #{_classifier_head.1} parent=1 // pred_fallthru
      _
    %v48 = vld [vmem:[%s0] sm:$0xff]
    %v49 = vld [vmem:[#allocation2] sm:$0xff]
    %v50 = vld [vmem:[#allocation2 + $0x8] sm:$0xff]
    %v51 = vld [vmem:[#allocation2 + $0x10] sm:$0xff]
    %v52 = vld [vmem:[#allocation2 + $0x18] sm:$0xff]
    %v53 = vld [vmem:[%s2] sm:$0x1]
    %v55 = vlaneseq
    %v56 = vshrl.u32 %v55, 7
    %v57 = vsub.s32 0, %v56
    %v58 = vrot.slane %v53, %v57
    %vm60 = vcmask 261120
    %v62 = vsel %vm60, %v48, 0
    %64 = vmatprep.subr.mxu0 0.0
    %65 = vmatpush1.msra.mxu0 %v49
    %66 = vmatprep.subr.mxu0 0.0
    %67 = vmatpush1.msra.mxu0 %v50
    %68 = vmatprep.subr.mxu0 0.0
    %69 = vmatpush1.msra.mxu0 %v51
    %70 = vmatprep.subr.mxu0 0.0
    %71 = vmatpush1.msra.mxu0 %v52
    %72 = vmatprep.subr.mxu0 0.0
    %73 = vmatpush1.msra.mxu0 0.0
    %74 = vmatprep.subr.mxu0 0.0
    %75 = vmatpush1.msra.mxu0 0.0
    %76 = vmatprep.subr.mxu0 0.0
    %77 = vmatpush1.msra.mxu0 0.0
    %78 = vmatprep.subr.mxu0 0.0
    %79 = vmatpush1.msra.mxu0 0.0
    %80 = vmatprep.subr.mxu0 0.0
    %81 = vmatpush1.msra.mxu0 0.0
    %82 = vmatprep.subr.mxu0 0.0
    %83 = vmatpush1.msra.mxu0 0.0
    %84 = vmatprep.subr.mxu0 0.0
    %85 = vmatpush1.msra.mxu0 0.0
    %86 = vmatprep.subr.mxu0 0.0
    %87 = vmatpush1.msra.mxu0 0.0
    %88 = vmatprep.subr.mxu0 0.0
    %89 = vmatpush1.msra.mxu0 0.0
    %90 = vmatprep.subr.mxu0 0.0
    %91 = vmatpush1.msra.mxu0 0.0
    %92 = vmatprep.subr.mxu0 0.0
    %93 = vmatpush1.msra.mxu0 0.0
    %94 = vmatprep.subr.mxu0 0.0
    %95 = vmatpush1.msra.mxu0 0.0
    %96 = vmatprep.subr.mxu0 0.0
    %97 = vmatpush1.msra.mxu0 0.0
    %98 = vmatprep.subr.mxu0 0.0
    %99 = vmatpush1.msra.mxu0 0.0
    %100 = vmatprep.subr.mxu0 0.0
    %101 = vmatpush1.msra.mxu0 0.0
    %102 = vmatprep.subr.mxu0 0.0
    %103 = vmatpush1.msra.mxu0 0.0
    %104 = vmatprep.subr.mxu0 0.0
    %105 = vmatpush1.msra.mxu0 0.0
    %106 = vmatprep.subr.mxu0 0.0
    %107 = vmatpush1.msra.mxu0 0.0
    %108 = vmatprep.subr.mxu0 0.0
    %109 = vmatpush1.msra.mxu0 0.0
    %110 = vmatprep.subr.mxu0 0.0
    %111 = vmatpush1.msra.mxu0 0.0
    %112 = vmatprep.subr.mxu0 0.0
    %113 = vmatpush1.msra.mxu0 0.0
    %114 = vmatprep.subr.mxu0 0.0
    %115 = vmatpush1.msra.mxu0 0.0
    %116 = vmatprep.subr.mxu0 0.0
    %117 = vmatpush1.msra.mxu0 0.0
    %118 = vmatprep.subr.mxu0 0.0
    %119 = vmatpush1.msra.mxu0 0.0
    %120 = vmatprep.subr.mxu0 0.0
    %121 = vmatpush1.msra.mxu0 0.0
    %122 = vmatprep.subr.mxu0 0.0
    %123 = vmatpush1.msra.mxu0 0.0
    %124 = vmatprep.subr.mxu0 0.0
    %125 = vmatpush1.msra.mxu0 0.0
    %126 = vmatprep.subr.mxu0 0.0
    %127 = vmatpush1.msra.mxu0 0.0
    %128 = vmatprep.mubr.f32.mxu0 0.0
    %129 = vmatmul.mubr.f32.gmra.mrb[0].mxu0 %v62
    %v130 = vpop.f32.mrb[0].mxu0
    %v131 = vadd.f32 %v58, %v130
    %v132 = vpop.f32.mrb[0].mxu0
    %133 = vdwg.mxu0
    %v134 = vmax.f32 %v131, 0.0
    %v135 = vld [vmem:[#allocation4] sm:$0xff]
    %v136 = vld [vmem:[#allocation4 + $0x8] sm:$0xff]
    %v137 = vld [vmem:[#allocation4 + $0x10] sm:$0xff]
    %v138 = vld [vmem:[#allocation4 + $0x18] sm:$0xff]
    %v139 = vld [vmem:[%s4] sm:$0x1]
    %v141 = vlaneseq
    %v142 = vshrl.u32 %v141, 7
    %v143 = vsub.s32 0, %v142
    %v144 = vrot.slane %v139, %v143
    %v147 = vsel %vm60, %v134, 0
    %149 = vmatprep.subr.mxu0 0.0
    %150 = vmatpush1.msra.mxu0 %v135
    %151 = vmatprep.subr.mxu0 0.0
    %152 = vmatpush1.msra.mxu0 %v136
    %153 = vmatprep.subr.mxu0 0.0
    %154 = vmatpush1.msra.mxu0 %v137
    %155 = vmatprep.subr.mxu0 0.0
    %156 = vmatpush1.msra.mxu0 %v138
    %157 = vmatprep.subr.mxu0 0.0
    %158 = vmatpush1.msra.mxu0 0.0
    %159 = vmatprep.subr.mxu0 0.0
    %160 = vmatpush1.msra.mxu0 0.0
    %161 = vmatprep.subr.mxu0 0.0
    %162 = vmatpush1.msra.mxu0 0.0
    %163 = vmatprep.subr.mxu0 0.0
    %164 = vmatpush1.msra.mxu0 0.0
    %165 = vmatprep.subr.mxu0 0.0
    %166 = vmatpush1.msra.mxu0 0.0
    %167 = vmatprep.subr.mxu0 0.0
    %168 = vmatpush1.msra.mxu0 0.0
    %169 = vmatprep.subr.mxu0 0.0
    %170 = vmatpush1.msra.mxu0 0.0
    %171 = vmatprep.subr.mxu0 0.0
    %172 = vmatpush1.msra.mxu0 0.0
    %173 = vmatprep.subr.mxu0 0.0
    %174 = vmatpush1.msra.mxu0 0.0
    %175 = vmatprep.subr.mxu0 0.0
    %176 = vmatpush1.msra.mxu0 0.0
    %177 = vmatprep.subr.mxu0 0.0
    %178 = vmatpush1.msra.mxu0 0.0
    %179 = vmatprep.subr.mxu0 0.0
    %180 = vmatpush1.msra.mxu0 0.0
    %181 = vmatprep.subr.mxu0 0.0
    %182 = vmatpush1.msra.mxu0 0.0
    %183 = vmatprep.subr.mxu0 0.0
    %184 = vmatpush1.msra.mxu0 0.0
    %185 = vmatprep.subr.mxu0 0.0
    %186 = vmatpush1.msra.mxu0 0.0
    %187 = vmatprep.subr.mxu0 0.0
    %188 = vmatpush1.msra.mxu0 0.0
    %189 = vmatprep.subr.mxu0 0.0
    %190 = vmatpush1.msra.mxu0 0.0
    %191 = vmatprep.subr.mxu0 0.0
    %192 = vmatpush1.msra.mxu0 0.0
    %193 = vmatprep.subr.mxu0 0.0
    %194 = vmatpush1.msra.mxu0 0.0
    %195 = vmatprep.subr.mxu0 0.0
    %196 = vmatpush1.msra.mxu0 0.0
    %197 = vmatprep.subr.mxu0 0.0
    %198 = vmatpush1.msra.mxu0 0.0
    %199 = vmatprep.subr.mxu0 0.0
    %200 = vmatpush1.msra.mxu0 0.0
    %201 = vmatprep.subr.mxu0 0.0
    %202 = vmatpush1.msra.mxu0 0.0
    %203 = vmatprep.subr.mxu0 0.0
    %204 = vmatpush1.msra.mxu0 0.0
    %205 = vmatprep.subr.mxu0 0.0
    %206 = vmatpush1.msra.mxu0 0.0
    %207 = vmatprep.subr.mxu0 0.0
    %208 = vmatpush1.msra.mxu0 0.0
    %209 = vmatprep.subr.mxu0 0.0
    %210 = vmatpush1.msra.mxu0 0.0
    %211 = vmatprep.subr.mxu0 0.0
    %212 = vmatpush1.msra.mxu0 0.0
    %213 = vmatprep.mubr.f32.mxu0 0.0
    %214 = vmatmul.mubr.f32.gmra.mrb[0].mxu0 %v147
    %v215 = vpop.f32.mrb[0].mxu0
    %v216 = vadd.f32 %v144, %v215
    %v217 = vpop.f32.mrb[0].mxu0
    %218 = vdwg.mxu0
    %219 = vmax.xlane.f32.xlu0 %v216
    %v220 = vpop.xlane.xlu0 %219
    %v221 = vsub.f32 %v216, %v220
    %v222 = vmul.f32 %v221, 1.442695
    %v223 = vpow.pop %v222
    %224 = vadd.xlane.f32.xlu0 %v223
    %v225 = vpop.xlane.xlu0 %224
    %v226 = vrcp.pop %v225
    %v227 = vmul.f32 %v223, %v226
    %228 = vst [vmem:[%s5] sm:$0xff] %v227
    // Predicated region
    $region30: #{_classifier_head.1} parent=1 // pred_check
      _
    $region31: #{_classifier_head.1} parent=1 // pred_check_branch
      %230 = sbr.rel (0) target = $region33
    $region32: #{_classifier_head.1} parent=1 // pred_region
      _
    $region33: #{_classifier_head.1} parent=1 // pred_fallthru
      _
    // Predicated region
    $region34: #{_classifier_head.1} parent=1 // pred_check
      _
    $region35: #{_classifier_head.1} parent=1 // pred_check_branch
      %232 = sbr.rel (0) target = $region37
    $region36: #{_classifier_head.1} parent=1 // pred_region
      _
    $region37: #{_classifier_head.1} parent=1 // pred_fallthru
      _
    %233 = vsyncpa [#allocation3], 1
    %234 = vsyncpa [#allocation5], 1

</llo_original>
